<compile_context>
chip_gen: v6e
topology: v6e:2x2x1
jax: 0.10.0
libtpu: 0.0.40
codegen_flags: <defaults>
</compile_context>

<pallas_src>
import math
from functools import partial

import jax
import jax.numpy as jnp
from jax.experimental import pallas as pl
from jax.experimental.pallas import tpu as pltpu


def _round_up(v, m):
    return (v + m - 1) // m * m


# --------------------------- Stage 1: tmp = x @ W + bias ---------------------

def _linear_bias_kernel(x_ref, w_ref, b_ref, tmp_ref):
    acc = jnp.dot(x_ref[...], w_ref[...], preferred_element_type=jnp.float32)
    tmp_ref[...] = (acc + b_ref[...]).astype(tmp_ref.dtype)


# ---------------- Stage 2: out = leaky_relu(G @ tmp), K-tiled ----------------

def _g_matmul_lrelu_kernel(g_ref, tmp_ref, o_ref, acc_ref, *,
                           k_tile, negative_slope, tmp_resident):
    k = pl.program_id(1)

    @pl.when(k == 0)
    def _():
        acc_ref[...] = jnp.zeros_like(acc_ref)

    if tmp_resident:
        # tmp lives fully in VMEM (constant index map) -> slice the K block.
        start = pl.multiple_of(k * k_tile, k_tile)
        tmp_blk = tmp_ref[pl.ds(start, k_tile), :]
    else:
        tmp_blk = tmp_ref[...]

    acc_ref[...] += jnp.dot(g_ref[...], tmp_blk,
                            preferred_element_type=jnp.float32)

    @pl.when(k == pl.num_programs(1) - 1)
    def _():
        acc = acc_ref[...]
        # leaky_relu with slope in [0, 1]:  max(x, slope * x)
        o_ref[...] = jnp.maximum(acc, negative_slope * acc).astype(o_ref.dtype)


def _choose_tiles(n):
    """Pick (n_pad, row_tile, k_tile) so tiles divide n_pad, satisfy the
    (8,128)/full-dim layout rules, give >=2 row tiles when possible (v7x
    megacore) and avoid padding G whenever N already fits."""
    if n >= 2048:
        row_tile, k_tile = 512, 1024
        n_pad = _round_up(n, 1024)          # lcm(row_tile, k_tile)
    else:
        n_pad = _round_up(n, 8)
        k_tile = n_pad                       # single K step
        if n_pad >= 16 and n_pad % 16 == 0:
            row_tile = n_pad // 2            # two row tiles -> both TCs busy
        else:
            row_tile = n_pad
    return n_pad, row_tile, k_tile


def hgcn_forward(x, G, weight, bias, *, negative_slope=0.25,
                 matmul_dtype=jnp.bfloat16):
    """leaky_relu(G @ (x @ weight + bias), negative_slope) via two Pallas kernels."""
    N, in_ft = x.shape
    out_ft = weight.shape[1]
    assert G.shape == (N, N)
    # max(x, s*x) formulation of leaky_relu requires slope in [0, 1].
    assert 0.0 <= negative_slope <= 1.0

    out_dtype = x.dtype
    if matmul_dtype is None:
        matmul_dtype = x.dtype
    matmul_dtype = jnp.dtype(matmul_dtype)

    n_pad, row_tile, k_tile = _choose_tiles(N)
    # Lane-dense output floor of 128; don't pad tiny out_ft any further.
    f_pad = _round_up(out_ft, 128)

    # --- prepare operands; never materialize an f32 padded copy of G ---
    G_in = G if G.dtype == matmul_dtype else G.astype(matmul_dtype)
    if n_pad != N:
        # Zero-padded G columns annihilate the bias-contaminated padded rows of
        # tmp; zero-padded G rows only produce output rows sliced off below.
        G_in = jnp.pad(G_in, ((0, n_pad - N), (0, n_pad - N)))
        x_in = jnp.pad(x, ((0, n_pad - N), (0, 0)))
    else:
        x_in = x
    w_in = weight if f_pad == out_ft else jnp.pad(
        weight, ((0, 0), (0, f_pad - out_ft)))
    b_in = bias.reshape(1, out_ft)
    if f_pad != out_ft:
        b_in = jnp.pad(b_in, ((0, 0), (0, f_pad - out_ft)))

    # ---- Stage 1: tmp = x @ W + b (row-parallel, lane-dense, cheap) ----
    tmp = pl.pallas_call(
        _linear_bias_kernel,
        out_shape=jax.ShapeDtypeStruct((n_pad, f_pad), matmul_dtype),
        grid_spec=pltpu.PrefetchScalarGridSpec(
            num_scalar_prefetch=0,
            grid=(n_pad // row_tile,),
            in_specs=[
                pl.BlockSpec((row_tile, in_ft), lambda i: (i, 0)),
                pl.BlockSpec((in_ft, f_pad), lambda i: (0, 0)),
                pl.BlockSpec((1, f_pad), lambda i: (0, 0)),
            ],
            out_specs=pl.BlockSpec((row_tile, f_pad), lambda i: (i, 0)),
        ),
        compiler_params=pltpu.CompilerParams(
            dimension_semantics=("parallel",),
        ),
    )(x_in, w_in, b_in)

    # ---- Stage 2 VMEM budgeting (resident tmp vs. K-tiled fallback) ----
    dt = matmul_dtype.itemsize
    ot = jnp.dtype(out_dtype).itemsize
    tmp_bytes = n_pad * f_pad * dt
    g_tile_bytes = row_tile * k_tile * dt
    out_tile_bytes = row_tile * f_pad * ot
    acc_bytes = row_tile * f_pad * 4

    # Keep tmp resident while it (conservatively x2 buffers) stays small.
    tmp_resident = 2 * tmp_bytes <= (16 << 20)
    if tmp_resident:
        tmp_spec = pl.BlockSpec((n_pad, f_pad), lambda i, k: (0, 0))
        est = 2 * tmp_bytes + 2 * g_tile_bytes + 2 * out_tile_bytes + acc_bytes
    else:
        tmp_spec = pl.BlockSpec((k_tile, f_pad), lambda i, k: (k, 0))
        est = (2 * k_tile * f_pad * dt + 2 * g_tile_bytes
               + 2 * out_tile_bytes + acc_bytes)

    # Explicit scoped-VMEM limit: stay <= ~48 MiB so the config also fits
    # v7x's 64 MiB physical VMEM with headroom (v5e/v6e have 128 MiB).
    vmem_limit = int(min(48 << 20, max(32 << 20, est + (8 << 20))))

    # ---- Stage 2: out = leaky_relu(G @ tmp) ----
    out_p = pl.pallas_call(
        partial(_g_matmul_lrelu_kernel, k_tile=k_tile,
                negative_slope=negative_slope, tmp_resident=tmp_resident),
        out_shape=jax.ShapeDtypeStruct((n_pad, f_pad), out_dtype),
        grid_spec=pltpu.PrefetchScalarGridSpec(
            num_scalar_prefetch=0,
            grid=(n_pad // row_tile, n_pad // k_tile),
            in_specs=[
                pl.BlockSpec((row_tile, k_tile), lambda i, k: (i, k)),
                tmp_spec,
            ],
            out_specs=pl.BlockSpec((row_tile, f_pad), lambda i, k: (i, 0)),
            scratch_shapes=[pltpu.VMEM((row_tile, f_pad), jnp.float32)],
        ),
        compiler_params=pltpu.CompilerParams(
            # rows independent (megacore-shardable); k is the reduction.
            dimension_semantics=("parallel", "arbitrary"),
            vmem_limit_bytes=vmem_limit,
        ),
    )(G_in, tmp)

    return out_p[:N, :out_ft]


if __name__ == "__main__":
    # Small shapes consistent with the module: N nodes, in_ft -> out_ft.
    N, in_ft, out_ft = 64, 32, 16

    key = jax.random.PRNGKey(0)
    kx, kg, kw, kb = jax.random.split(key, 4)

    x = jax.random.normal(kx, (N, in_ft), dtype=jnp.float32)
    G = jax.random.normal(kg, (N, N), dtype=jnp.float32)

    # Deterministic parameter init mirroring reset_parameters():
    # uniform(-stdv, stdv) with stdv = 1 / sqrt(out_ft).
    stdv = 1.0 / math.sqrt(out_ft)
    weight = jax.random.uniform(
        kw, (in_ft, out_ft), dtype=jnp.float32, minval=-stdv, maxval=stdv
    )
    bias = jax.random.uniform(
        kb, (out_ft,), dtype=jnp.float32, minval=-stdv, maxval=stdv
    )

    # Reference in plain JAX (HGCN.forward semantics).
    embed_ref = G @ (x @ weight + bias)
    ref = jnp.where(embed_ref >= 0, embed_ref, 0.25 * embed_ref)

    # Full-precision path (no G cast / no G copy at these shapes).
    out_f32 = jax.block_until_ready(
        hgcn_forward(x, G, weight, bias, matmul_dtype=jnp.float32)
    )
    assert out_f32.shape == (N, out_ft)
    assert jnp.allclose(out_f32, ref, atol=1e-4, rtol=1e-4)

    # Default bf16 path for the HBM-bound G / tmp traffic (f32 accumulation).
    out_bf16 = jax.block_until_ready(hgcn_forward(x, G, weight, bias))
    assert out_bf16.shape == (N, out_ft)
    assert jnp.allclose(out_bf16, ref, atol=2.5e-1, rtol=5e-2)

    print("KERNEL_OK")
</pallas_src>

<mosaic_0001>
module attributes {stable_mosaic.version = 11 : i64} {
  func.func @_linear_bias_kernel(%arg0: i32, %arg1: memref<32x32xf32, #tpu.memory_space<vmem>>, %arg2: memref<32x128xf32, #tpu.memory_space<vmem>>, %arg3: memref<1x128xf32, #tpu.memory_space<vmem>>, %arg4: memref<32x128xf32, #tpu.memory_space<vmem>>) attributes {dimension_semantics = [#tpu.dimension_semantics<parallel>], iteration_bounds = array<i64: 2>, scalar_prefetch = 0 : i64, scratch_operands = 0 : i64, tpu.core_type = #tpu.core_type<tc>, window_params = [{transform_indices = @transform_0, window_bounds = array<i64: 32, 32>}, {pipeline_mode = #tpu.pipeline_mode<synchronous>, transform_indices = @transform_1, window_bounds = array<i64: 32, 128>}, {pipeline_mode = #tpu.pipeline_mode<synchronous>, transform_indices = @transform_2, window_bounds = array<i64: 1, 128>}, {transform_indices = @transform_3, window_bounds = array<i64: 32, 128>}]} {
    %c0 = arith.constant 0 : index
    %c0_0 = arith.constant 0 : index
    %0 = vector.load %arg1[%c0, %c0_0] : memref<32x32xf32, #tpu.memory_space<vmem>>, vector<32x32xf32>
    %c0_1 = arith.constant 0 : index
    %c0_2 = arith.constant 0 : index
    %1 = vector.load %arg2[%c0_1, %c0_2] : memref<32x128xf32, #tpu.memory_space<vmem>>, vector<32x128xf32>
    %cst = arith.constant dense<0.000000e+00> : vector<32x128xf32>
    %2 = tpu.matmul %0, %1, %cst {dimension_numbers = #tpu.dot_dimension_numbers<[1], [0], [0], [1], [0, 0, 1, 1], [], []>} : vector<32x32xf32>, vector<32x128xf32>, vector<32x128xf32> -> vector<32x128xf32>
    %c0_3 = arith.constant 0 : index
    %c0_4 = arith.constant 0 : index
    %3 = vector.load %arg3[%c0_3, %c0_4] : memref<1x128xf32, #tpu.memory_space<vmem>>, vector<1x128xf32>
    %4 = vector.broadcast %3 : vector<1x128xf32> to vector<32x128xf32>
    %5 = arith.addf %2, %4 : vector<32x128xf32>
    %c0_5 = arith.constant 0 : index
    %c0_6 = arith.constant 0 : index
    %6 = vector.load %arg4[%c0_5, %c0_6] : memref<32x128xf32, #tpu.memory_space<vmem>>, vector<32x128xf32>
    tpu.vector_store %arg4[%c0_5, %c0_6], %5 {strides = array<i32>} : memref<32x128xf32, #tpu.memory_space<vmem>>, vector<32x128xf32>,
    return
  }
  func.func @transform_0(%arg0: i32) -> (i32, i32) {
    %c0_i32 = arith.constant 0 : i32
    %c0_i32_0 = arith.constant 0 : i32
    return %arg0, %c0_i32 : i32, i32
  }
  func.func @transform_1(%arg0: i32) -> (i32, i32) {
    %c0_i32 = arith.constant 0 : i32
    %c0_i32_0 = arith.constant 0 : i32
    %c0_i32_1 = arith.constant 0 : i32
    return %c0_i32, %c0_i32_0 : i32, i32
  }
  func.func @transform_2(%arg0: i32) -> (i32, i32) {
    %c0_i32 = arith.constant 0 : i32
    %c0_i32_0 = arith.constant 0 : i32
    %c0_i32_1 = arith.constant 0 : i32
    return %c0_i32, %c0_i32_0 : i32, i32
  }
  func.func @transform_3(%arg0: i32) -> (i32, i32) {
    %c0_i32 = arith.constant 0 : i32
    %c0_i32_0 = arith.constant 0 : i32
    return %arg0, %c0_i32 : i32, i32
  }
}

</mosaic_0001>

<llo_original>
// kernel: tpu_custom_call.1
$region0: #{tpu_custom_call.1}
  #allocation0 [shape = 'u32[]', space=smem, size = 0x4, offset = 0x4, fixed_abs, tag = 'smem constant byte address 0x4 - core index']
  #allocation1 [shape = 'u32[144,128]{1,0:T(1,128)}', space=vmem, size = 0x12000, scoped, tag = 'internal scratch']
  %s0 = inlined_call_operand.vmem [shape: f32[64,32], index: 0, kind: input, shape index: {}]
  %s1 = inlined_call_operand.vmem [shape: f32[32,128], index: 1, kind: input, shape index: {}]
  %s2 = inlined_call_operand.vmem [shape: f32[1,128], index: 2, kind: input, shape index: {}]
  %s3 = inlined_call_operand.hbm [shape: f32[64,128], index: 3, kind: output, shape index: {}]
  %s4 = sld [smem:[#allocation0]]
  $region45: #{tpu_custom_call.1} parent=0
    _
  %s6 = ssub.s32 1, %s4
  %s7 = scalar_select 0, %s6, %s4
  $region1: #{tpu_custom_call.1} parent=0
    #allocation2 [shape = 'u8[32768]{0}', space=vmem, size = 0x8000, scoped, tag = 'output window, operand 0']
    #allocation3 [shape = 's32[2]{0}', space=sflag, size = 0x8, scoped, tag = 'scoped memory for tpu_custom_call.1']
    %8 = vsyncpa [#allocation3], 0
    %s9 = scalar_lea.sflag [#allocation3], 1
    %10 = vsyncpa %s9, 0
    loop: start=0, step=1, limit=4
    $region2: #{tpu_custom_call.1} parent=1 // loop_pre_header
      _
    $region3: #{tpu_custom_call.1} parent=1 // loop_header
      %s12 = sphi 0, %s16
      %p13 = scmp.ge.s32.totalorder %s12, 4
      %s22 = sphi 0, %s24
      %s25 = sphi 0, %s22
      %s26 = sphi 0, %s25
      %s42 = sphi 0, %s26
      %s46 = sphi 0, %s46
      %s48 = sphi 0, %s46
      %s49 = sphi 0, %s48
      %s63 = sphi 0, %s49
      %s67 = sphi 0, %s67
      %s69 = sphi 0, %s67
      %s70 = sphi 0, %s69
      %s84 = sphi 0, %s70
      %s90 = sphi 0, %s92
      %s93 = sphi 0, %s90
      %s94 = sphi 0, %s93
      %s110 = sphi 0, %s94
    $region4: #{tpu_custom_call.1} parent=1 // loop_header_branch
      %15 = sbr.rel (%p13) target = $region8
    $region5: #{tpu_custom_call.1} parent=1 // loop_body
      %s17 = ssub.s32 %s12, 1
      %s18 = ssub.s32 %s12, 2
      %s19 = sadd.s32 %s12, 1
      %s20 = ssub.s32 %s12, %s19
      %p21 = scmp.eq.s32.totalorder %s20, 0
      %s23 = sadd.s32 %s22, 1
      %s24 = scalar_select %p21, %s22, %s23
      %p27 = pneg %p21
      %p28 = scmp.eq.s32.totalorder %s12, 1
      %p29 = por %p27, %p28
      %p30 = scmp.ne.s32.totalorder %s22, %s25
      %p31 = scmp.eq.s32.totalorder %s12, 0
      %p32 = por %p30, %p31
      %p33 = scmp.ne.s32.totalorder %s22, %s25
      %p34 = scmp.eq.s32.totalorder %s17, 1
      %p35 = por %p33, %p34
      %p36 = scmp.ne.s32.totalorder %s25, %s26
      %p37 = scmp.eq.s32.totalorder %s17, 0
      %p38 = por %p36, %p37
      %p39 = scmp.ne.s32.totalorder %s25, %s26
      %p40 = scmp.eq.s32.totalorder %s18, 1
      %p41 = por %p39, %p40
      %p43 = scmp.ne.s32.totalorder %s26, %s42
      %p44 = scmp.eq.s32.totalorder %s18, 0
      %p45 = por %p43, %p44
      %s47 = sadd.s32 %s46, 1
      %p50 = scmp.eq.s32.totalorder %s12, 1
      %p51 = scmp.ne.s32.totalorder %s46, %s48
      %p52 = scmp.eq.s32.totalorder %s12, 0
      %p53 = por %p51, %p52
      %p54 = scmp.ne.s32.totalorder %s46, %s48
      %p55 = scmp.eq.s32.totalorder %s17, 1
      %p56 = por %p54, %p55
      %p57 = scmp.ne.s32.totalorder %s48, %s49
      %p58 = scmp.eq.s32.totalorder %s17, 0
      %p59 = por %p57, %p58
      %p60 = scmp.ne.s32.totalorder %s48, %s49
      %p61 = scmp.eq.s32.totalorder %s18, 1
      %p62 = por %p60, %p61
      %p64 = scmp.ne.s32.totalorder %s49, %s63
      %p65 = scmp.eq.s32.totalorder %s18, 0
      %p66 = por %p64, %p65
      %s68 = sadd.s32 %s67, 1
      %p71 = scmp.eq.s32.totalorder %s12, 1
      %p72 = scmp.ne.s32.totalorder %s67, %s69
      %p73 = scmp.eq.s32.totalorder %s12, 0
      %p74 = por %p72, %p73
      %p75 = scmp.ne.s32.totalorder %s67, %s69
      %p76 = scmp.eq.s32.totalorder %s17, 1
      %p77 = por %p75, %p76
      %p78 = scmp.ne.s32.totalorder %s69, %s70
      %p79 = scmp.eq.s32.totalorder %s17, 0
      %p80 = por %p78, %p79
      %p81 = scmp.ne.s32.totalorder %s69, %s70
      %p82 = scmp.eq.s32.totalorder %s18, 1
      %p83 = por %p81, %p82
      %p85 = scmp.ne.s32.totalorder %s70, %s84
      %p86 = scmp.eq.s32.totalorder %s18, 0
      %p87 = por %p85, %p86
      %s88 = ssub.s32 %s12, %s19
      %p89 = scmp.eq.s32.totalorder %s88, 0
      %s91 = sadd.s32 %s90, 1
      %s92 = scalar_select %p89, %s90, %s91
      %p95 = pneg %p89
      %p96 = scmp.eq.s32.totalorder %s12, 1
      %p97 = por %p95, %p96
      %p98 = scmp.ne.s32.totalorder %s90, %s93
      %p99 = scmp.eq.s32.totalorder %s12, 0
      %p100 = por %p98, %p99
      %p101 = scmp.ne.s32.totalorder %s90, %s93
      %p102 = scmp.eq.s32.totalorder %s17, 1
      %p103 = por %p101, %p102
      %p104 = scmp.ne.s32.totalorder %s93, %s94
      %p105 = scmp.eq.s32.totalorder %s17, 0
      %p106 = por %p104, %p105
      %p107 = scmp.ne.s32.totalorder %s93, %s94
      %p108 = scmp.eq.s32.totalorder %s18, 1
      %p109 = por %p107, %p108
      %p111 = scmp.ne.s32.totalorder %s94, %s110
      %p112 = scmp.eq.s32.totalorder %s18, 0
      %p113 = por %p111, %p112
      %p114 = scmp.le.s32.totalorder 1, %s12
      %p115 = scmp.lt.s32.totalorder %s12, 3
      %p116 = pnand %p114, %p115
      %p117 = pneg %p116
      // Predicated region
      $region9: #{tpu_custom_call.1} parent=5 // pred_check
        _
      $region10: #{tpu_custom_call.1} parent=5 // pred_check_branch
        %119 = sbr.rel (%p116) target = $region12
      $region11: #{tpu_custom_call.1} parent=5 // pred_region
        %s120 = ssub.s32 %s12, 1
        // Predicated region
        $region13: #{tpu_custom_call.1} parent=11 // pred_check
          %p121 = pneg %p59
        $region14: #{tpu_custom_call.1} parent=11 // pred_check_branch
          %123 = sbr.rel (%p121) target = $region16
        $region15: #{tpu_custom_call.1} parent=11 // pred_region
          _
        $region16: #{tpu_custom_call.1} parent=11 // pred_fallthru
          _
        // Predicated region
        $region17: #{tpu_custom_call.1} parent=11 // pred_check
          %p124 = pneg %p80
        $region18: #{tpu_custom_call.1} parent=11 // pred_check_branch
          %126 = sbr.rel (%p124) target = $region20
        $region19: #{tpu_custom_call.1} parent=11 // pred_region
          _
        $region20: #{tpu_custom_call.1} parent=11 // pred_fallthru
          _
      $region12: #{tpu_custom_call.1} parent=5 // pred_fallthru
        _
      %p127 = scmp.lt.s32.totalorder %s12, 2
      // Predicated region
      $region21: #{tpu_custom_call.1} parent=5 // pred_check
        %p128 = pneg %p127
      $region22: #{tpu_custom_call.1} parent=5 // pred_check_branch
        %130 = sbr.rel (%p128) target = $region24
      $region23: #{tpu_custom_call.1} parent=5 // pred_region
        // Predicated region
        $region25: #{tpu_custom_call.1} parent=23 // pred_check
          %p131 = pneg %p32
        $region26: #{tpu_custom_call.1} parent=23 // pred_check_branch
          %133 = sbr.rel (%p131) target = $region28
        $region27: #{tpu_custom_call.1} parent=23 // pred_region
          %s134 = smul.u32 4, %s12
          %p135 = scmp.lt.s32.totalorder %s134, 7
          %s136 = scalar_select %p135, %s134, 7
          %s137 = smul.addr %s136, 8
          %s138 = scalar_lea.vmem %s0, %s137
          %s139 = smul.u32 4, %s12
        $region28: #{tpu_custom_call.1} parent=23 // pred_fallthru
          _
      $region24: #{tpu_custom_call.1} parent=5 // pred_fallthru
        _
      %p140 = scmp.le.s32.totalorder 1, %s12
      %p141 = scmp.lt.s32.totalorder %s12, 3
      %p142 = pnand %p140, %p141
      %p143 = pneg %p142
      // Predicated region
      $region29: #{tpu_custom_call.1} parent=5 // pred_check
        _
      $region30: #{tpu_custom_call.1} parent=5 // pred_check_branch
        %145 = sbr.rel (%p142) target = $region32
      $region31: #{tpu_custom_call.1} parent=5 // pred_region
        %s146 = ssub.s32 %s12, 1
        %s147 = smul.u32 4, %s17
        %p148 = scmp.lt.s32.totalorder %s147, 7
        %s149 = scalar_select %p148, %s147, 7
        %s150 = smul.addr %s149, 8
        %s151 = scalar_lea.vmem %s0, %s150
        %p152 = pneg %p38
        %p153 = pneg %p35
        %p154 = pneg %p59
        %p155 = pneg %p56
        %p156 = pneg %p80
        %p157 = pneg %p77
        %p158 = pneg %p106
        %p159 = pneg %p103
        %s160 = sand.u32 %s93, 1
        %s161 = scalar_lea.sflag [#allocation3], %s160
        %s162 = sand.u32 %s93, 1
        %s163 = smul.addr %s162, 32
        %s164 = scalar_lea.vmem [#allocation2], %s163
        %s165 = smul.u32 4, %s17
        %p166 = scmp.lt.s32.totalorder %s165, 7
        %s167 = scalar_select %p166, %s165, 7
        %s168 = smul.addr %s167, 8
        %s169 = scalar_lea.vmem %s0, %s168
        %s170 = smul.u32 4, %s17
        %s171 = smul.u32 4, %s17
        %v172 = vld [vmem:[%s169] sm:$0xff]
        %v173 = vld [vmem:[%s169 + $0x8] sm:$0xff]
        %v174 = vld [vmem:[%s169 + $0x10] sm:$0xff]
        %v175 = vld [vmem:[%s169 + $0x18] sm:$0xff]
        %v176 = vld [vmem:[%s1] sm:$0xff]
        %v177 = vld [vmem:[%s1 + $0x8] sm:$0xff]
        %v178 = vld [vmem:[%s1 + $0x10] sm:$0xff]
        %v179 = vld [vmem:[%s1 + $0x18] sm:$0xff]
        %v180 = vld [vmem:[%s2] sm:$0x1]
        %v182 = vlaneseq
        %v183 = vshrl.u32 %v182, 7
        %v184 = vsub.s32 0, %v183
        %v185 = vrot.slane %v180, %v184
        %vm187 = vcmask 261120
        %v189 = vsel %vm187, %v172, 0
        %v192 = vsel %vm187, %v173, 0
        %v195 = vsel %vm187, %v174, 0
        %v198 = vsel %vm187, %v175, 0
        %200 = vmatprep.subr.mxu0 0.0
        %201 = vmatpush1.msra.mxu0 0.0
        %202 = vmatprep.subr.mxu0 0.0
        %203 = vmatpush1.msra.mxu0 0.0
        %204 = vmatprep.subr.mxu0 0.0
        %205 = vmatpush1.msra.mxu0 0.0
        %206 = vmatprep.subr.mxu0 0.0
        %207 = vmatpush1.msra.mxu0 0.0
        %208 = vmatprep.subr.mxu0 0.0
        %209 = vmatpush1.msra.mxu0 0.0
        %210 = vmatprep.subr.mxu0 0.0
        %211 = vmatpush1.msra.mxu0 0.0
        %212 = vmatprep.subr.mxu0 0.0
        %213 = vmatpush1.msra.mxu0 0.0
        %214 = vmatprep.subr.mxu0 0.0
        %215 = vmatpush1.msra.mxu0 0.0
        %216 = vmatprep.subr.mxu0 0.0
        %217 = vmatpush1.msra.mxu0 0.0
        %218 = vmatprep.subr.mxu0 0.0
        %219 = vmatpush1.msra.mxu0 0.0
        %220 = vmatprep.subr.mxu0 0.0
        %221 = vmatpush1.msra.mxu0 0.0
        %222 = vmatprep.subr.mxu0 0.0
        %223 = vmatpush1.msra.mxu0 0.0
        %224 = vmatprep.subr.mxu0 0.0
        %225 = vmatpush1.msra.mxu0 %v179
        %226 = vmatprep.subr.mxu0 0.0
        %227 = vmatpush1.msra.mxu0 %v178
        %228 = vmatprep.subr.mxu0 0.0
        %229 = vmatpush1.msra.mxu0 %v177
        %230 = vmatprep.subr.mxu0 0.0
        %231 = vmatpush1.msra.mxu0 %v176
        %232 = vmatprep.subr.mxu0 0.0
        %233 = vmatpush2.msra.mxu0 0.0
        %234 = vmatprep.subr.mxu0 0.0
        %235 = vmatpush2.msra.mxu0 0.0
        %236 = vmatprep.subr.mxu0 0.0
        %237 = vmatpush2.msra.mxu0 0.0
        %238 = vmatprep.subr.mxu0 0.0
        %239 = vmatpush2.msra.mxu0 0.0
        %240 = vmatprep.subr.mxu0 0.0
        %241 = vmatpush2.msra.mxu0 0.0
        %242 = vmatprep.subr.mxu0 0.0
        %243 = vmatpush2.msra.mxu0 0.0
        %244 = vmatprep.subr.mxu0 0.0
        %245 = vmatpush2.msra.mxu0 0.0
        %246 = vmatprep.subr.mxu0 0.0
        %247 = vmatpush2.msra.mxu0 0.0
        %248 = vmatprep.subr.mxu0 0.0
        %249 = vmatpush2.msra.mxu0 0.0
        %250 = vmatprep.subr.mxu0 0.0
        %251 = vmatpush2.msra.mxu0 0.0
        %252 = vmatprep.subr.mxu0 0.0
        %253 = vmatpush2.msra.mxu0 0.0
        %254 = vmatprep.subr.mxu0 0.0
        %255 = vmatpush2.msra.mxu0 0.0
        %256 = vmatprep.subr.mxu0 0.0
        %257 = vmatpush2.msra.mxu0 0.0
        %258 = vmatprep.subr.mxu0 0.0
        %259 = vmatpush2.msra.mxu0 0.0
        %260 = vmatprep.subr.mxu0 0.0
        %261 = vmatpush2.msra.mxu0 0.0
        %262 = vmatprep.subr.mxu0 0.0
        %263 = vmatpush2.msra.mxu0 0.0
        %264 = vmatprep.mubr.f32.mxu0 0.0
        %265 = vmatmul.mubr.f32.gmra.mxu0 %v189
        %v266 = vpop.f32.mrf.mxu0
        %v267 = vadd.f32 %v185, %v266
        %v268 = vpop.f32.mrf.mxu0
        %269 = vmatprep.mubr.f32.mxu0 0.0
        %270 = vmatmul.mubr.f32.gmra.mxu0 %v192
        %v271 = vpop.f32.mrf.mxu0
        %v272 = vadd.f32 %v185, %v271
        %v273 = vpop.f32.mrf.mxu0
        %274 = vmatprep.mubr.f32.mxu0 0.0
        %275 = vmatmul.mubr.f32.gmra.mxu0 %v195
        %v276 = vpop.f32.mrf.mxu0
        %v277 = vadd.f32 %v185, %v276
        %v278 = vpop.f32.mrf.mxu0
        %279 = vmatprep.mubr.f32.mxu0 0.0
        %280 = vmatmul.mubr.f32.gmra.mxu0 %v198
        %v281 = vpop.f32.mrf.mxu0
        %v282 = vadd.f32 %v185, %v281
        %v283 = vpop.f32.mrf.mxu0
        %284 = vdwg.mxu0
        %285 = vst [vmem:[%s164] sm:$0xff] %v267
        %286 = vst [vmem:[%s164 + $0x8] sm:$0xff] %v272
        %287 = vst [vmem:[%s164 + $0x10] sm:$0xff] %v277
        %288 = vst [vmem:[%s164 + $0x18] sm:$0xff] %v282
        %s289 = sand.u32 %s93, 1
        %s290 = scalar_lea.sflag [#allocation3], %s289
        %s291 = sand.u32 %s93, 1
        %s292 = smul.addr %s291, 32
        %s293 = scalar_lea.vmem [#allocation2], %s292
        // Predicated region
        $region33: #{tpu_custom_call.1} parent=31 // pred_check
          %p294 = pneg %p103
        $region34: #{tpu_custom_call.1} parent=31 // pred_check_branch
          %296 = sbr.rel (%p294) target = $region36
        $region35: #{tpu_custom_call.1} parent=31 // pred_region
          %s297 = smul.u32 4, %s17
          %s299 = ssub.s32 512, 512
          %300 = vsyncadd %s290, %s299
          %s301 = smul.addr %s297, 128
          %s302 = scalar_lea.hbm %s3, %s301
          %s303 = sshll.u32 %s293, 4
          %s304 = int_to_ptr.vmem [resolvable:$true] %s303
          %309 = dma.vmem_to_hbm [thread:$0]  %s304, 512, %s302, %s290, 128, 128, 8
        $region36: #{tpu_custom_call.1} parent=31 // pred_fallthru
          _
      $region32: #{tpu_custom_call.1} parent=5 // pred_fallthru
        _
      %p310 = scmp.le.s32.totalorder 2, %s12
      // Predicated region
      $region37: #{tpu_custom_call.1} parent=5 // pred_check
        %p311 = pneg %p310
      $region38: #{tpu_custom_call.1} parent=5 // pred_check_branch
        %313 = sbr.rel (%p311) target = $region40
      $region39: #{tpu_custom_call.1} parent=5 // pred_region
        %s314 = ssub.s32 %s12, 2
        // Predicated region
        $region41: #{tpu_custom_call.1} parent=39 // pred_check
          %p315 = pneg %p109
        $region42: #{tpu_custom_call.1} parent=39 // pred_check_branch
          %317 = sbr.rel (%p315) target = $region44
        $region43: #{tpu_custom_call.1} parent=39 // pred_region
          %s318 = sand.u32 %s94, 1
          %s319 = scalar_lea.sflag [#allocation3], %s318
          %s320 = sand.u32 %s94, 1
          %s321 = smul.addr %s320, 32
          %s322 = scalar_lea.vmem [#allocation2], %s321
          %323 = dma.done %s319, 512
        $region44: #{tpu_custom_call.1} parent=39 // pred_fallthru
          _
      $region40: #{tpu_custom_call.1} parent=5 // pred_fallthru
        _
    $region6: #{tpu_custom_call.1} parent=1 // loop_footer
      %s16 = sadd.s32 1, %s12
    $region7: #{tpu_custom_call.1} parent=1 // loop_footer_branch
      %11 = sbr.rel target = $region3
    $region8: #{tpu_custom_call.1} parent=1 // loop_exit
      _
    %324 = vsyncpa [#allocation3], 1
    %s325 = scalar_lea.sflag [#allocation3], 1
    %326 = vsyncpa %s325, 1

</llo_original>
